<compile_context>
chip_gen: v7x
topology: tpu7x:2x2x1
jax: 0.10.0
libtpu: 0.0.40
codegen_flags: <defaults>
</compile_context>

<pallas_src>
import jax
import jax.numpy as jnp
from jax.experimental import pallas as pl
from jax.experimental.pallas import tpu as pltpu


def lipschitz_linear_kernel(c_ref, x_ref, wt_ref, b_ref, o_ref,
                            acc_ref, rowsum_ref):
    k = pl.program_id(2)

    @pl.when(k == 0)
    def _init():
        acc_ref[...] = jnp.zeros_like(acc_ref)
        rowsum_ref[...] = jnp.zeros_like(rowsum_ref)

    wt = wt_ref[...]                                   # (tk, tn) = W^T tile
    # MXU matmul with f32 accumulation.
    acc_ref[...] += jnp.dot(x_ref[...], wt, preferred_element_type=jnp.float32)
    # Fold |W| row-sum (over in_features) into the same K loop; result is
    # already lane-aligned as (1, tn).  Accumulate in f32.
    rowsum_ref[...] += jnp.sum(jnp.abs(wt.astype(jnp.float32)),
                               axis=0, keepdims=True)

    @pl.when(k == pl.num_programs(2) - 1)
    def _finalize():
        c = c_ref[0, 0]
        # Numerically stable softplus: max(c,0) + log1p(exp(-|c|)).
        lipc = jnp.maximum(c, 0.0) + jnp.log1p(jnp.exp(-jnp.abs(c)))
        # rowsum == 0 (all-zero row / padded column) -> inf -> clamped to 1.0,
        # matching the PyTorch reference behaviour.
        scale = jnp.minimum(lipc * pl.reciprocal(rowsum_ref[...], approx=False),
                            1.0)                        # (1, tn)
        o_ref[...] = (acc_ref[...] * scale + b_ref[...]).astype(o_ref.dtype)


def _round_up(x, m):
    return ((x + m - 1) // m) * m


def _pad2d(a, rows, cols):
    r, c = a.shape
    if r == rows and c == cols:
        return a
    return jnp.pad(a, ((0, rows - r), (0, cols - c)))


def lipschitz_linear(x, weight, bias, c, *, tm=256, tn=256, tk=512):
    """x: (B, in), weight: (out, in), bias: (out,), c: shape-(1,) scalar."""
    B, in_f = x.shape
    out_f, _ = weight.shape

    # Pre-transpose once in the wrapper so the kernel is a clean (M,K)@(K,N).
    wt = weight.T                                      # (in, out)

    # Adaptive tile sizes: sublane-aligned M tile, lane-aligned N/K tiles.
    tm = min(tm, _round_up(B, 8))
    tn = min(tn, _round_up(out_f, 128))
    tk = min(tk, _round_up(in_f, 128))

    M = _round_up(B, tm)
    N = _round_up(out_f, tn)
    K = _round_up(in_f, tk)

    x_p = _pad2d(x, M, K)
    wt_p = _pad2d(wt, K, N)
    b_p = _pad2d(bias.reshape(1, out_f).astype(x.dtype), 1, N)
    c2d = c.reshape(1, 1).astype(jnp.float32)

    grid = (M // tm, N // tn, K // tk)

    out = pl.pallas_call(
        lipschitz_linear_kernel,
        out_shape=jax.ShapeDtypeStruct((M, N), x.dtype),
        grid_spec=pltpu.PrefetchScalarGridSpec(
            num_scalar_prefetch=0,
            grid=grid,
            in_specs=[
                pl.BlockSpec(memory_space=pltpu.MemorySpace.SMEM),  # c (scalar)
                pl.BlockSpec((tm, tk), lambda i, j, k: (i, k)),     # x
                pl.BlockSpec((tk, tn), lambda i, j, k: (k, j)),     # W^T
                pl.BlockSpec((1, tn), lambda i, j, k: (0, j)),      # bias
            ],
            out_specs=pl.BlockSpec((tm, tn), lambda i, j, k: (i, j)),
            scratch_shapes=[
                pltpu.VMEM((tm, tn), jnp.float32),   # matmul accumulator
                pltpu.VMEM((1, tn), jnp.float32),    # |W| row-sum accumulator
            ],
        ),
        compiler_params=pltpu.CompilerParams(
            dimension_semantics=("parallel", "parallel", "arbitrary"),
            vmem_limit_bytes=32 * 1024 * 1024,
        ),
    )(c2d, x_p, wt_p, b_p)

    return out[:B, :out_f]


def init_params(key, in_features, out_features):
    """Deterministic init matching the PyTorch module's initialize_parameters()."""
    stdv = 1.0 / (in_features ** 0.5)
    kw, kb = jax.random.split(key)
    weight = jax.random.uniform(
        kw, (out_features, in_features), jnp.float32, minval=-stdv, maxval=stdv)
    bias = jax.random.uniform(
        kb, (out_features,), jnp.float32, minval=-stdv, maxval=stdv)
    c = jnp.max(jnp.sum(jnp.abs(weight), axis=1)).reshape(1)
    return weight, bias, c


def reference(x, weight, bias, c):
    lipc = jax.nn.softplus(c[0])
    scale = jnp.minimum(lipc / jnp.sum(jnp.abs(weight), axis=1), 1.0)
    return x @ (weight * scale[:, None]).T + bias[None, :]


if __name__ == "__main__":
    key = jax.random.PRNGKey(0)

    # Test 1: small, unaligned shapes (exercises padding + masked slicing).
    in_f, out_f, batch = 32, 16, 8
    kp, kx, key = jax.random.split(key, 3)
    weight, bias, c = init_params(kp, in_f, out_f)
    x = jax.random.normal(kx, (batch, in_f), jnp.float32)
    out = jax.block_until_ready(lipschitz_linear(x, weight, bias, c))
    ref = reference(x, weight, bias, c)
    assert out.shape == (batch, out_f)
    assert jnp.allclose(out, ref, atol=1e-4, rtol=1e-4), "mismatch (small shapes)"

    # Test 2: multi-tile grid (exercises the K-folded row-sum and M/N/K tiling)
    # at small shapes by forcing small tiles.
    in_f, out_f, batch = 256, 256, 16
    kp, kx = jax.random.split(key)
    weight, bias, c = init_params(kp, in_f, out_f)
    x = jax.random.normal(kx, (batch, in_f), jnp.float32)
    out = jax.block_until_ready(
        lipschitz_linear(x, weight, bias, c, tm=8, tn=128, tk=128))
    ref = reference(x, weight, bias, c)
    assert out.shape == (batch, out_f)
    assert jnp.allclose(out, ref, atol=1e-4, rtol=1e-4), "mismatch (tiled shapes)"

    print("KERNEL_OK")
</pallas_src>

<mosaic_0001>
module attributes {stable_mosaic.version = 11 : i64} {
  func.func @lipschitz_linear_kernel(%arg0: i32, %arg1: i32, %arg2: i32, %arg3: memref<1x1xf32, #tpu.memory_space<smem>>, %arg4: memref<8x128xf32, #tpu.memory_space<vmem>>, %arg5: memref<128x128xf32, #tpu.memory_space<vmem>>, %arg6: memref<1x128xf32, #tpu.memory_space<vmem>>, %arg7: memref<8x128xf32, #tpu.memory_space<vmem>>, %arg8: memref<8x128xf32, #tpu.memory_space<vmem>>, %arg9: memref<1x128xf32, #tpu.memory_space<vmem>>) attributes {dimension_semantics = [#tpu.dimension_semantics<parallel>, #tpu.dimension_semantics<parallel>, #tpu.dimension_semantics<arbitrary>], iteration_bounds = array<i64: 1, 1, 1>, scalar_prefetch = 0 : i64, scratch_operands = 2 : i64, tpu.core_type = #tpu.core_type<tc>, window_params = [{transform_indices = @transform_0, window_bounds = array<i64: 1, 1>}, {transform_indices = @transform_1, window_bounds = array<i64: 8, 128>}, {transform_indices = @transform_2, window_bounds = array<i64: 128, 128>}, {transform_indices = @transform_3, window_bounds = array<i64: 1, 128>}, {transform_indices = @transform_4, window_bounds = array<i64: 8, 128>}]} {
    %c0_i32 = arith.constant 0 : i32
    %0 = arith.cmpi eq, %arg2, %c0_i32 : i32
    %1 = arith.extui %0 : i1 to i32
    %c0_i32_0 = arith.constant 0 : i32
    %2 = arith.cmpi ne, %1, %c0_i32_0 : i32
    scf.if %2 {
      %cst_15 = arith.constant 0.000000e+00 : f32
      %18 = vector.broadcast %cst_15 : f32 to vector<8x128xf32>
      %c0_16 = arith.constant 0 : index
      %c0_17 = arith.constant 0 : index
      %19 = vector.load %arg8[%c0_16, %c0_17] : memref<8x128xf32, #tpu.memory_space<vmem>>, vector<8x128xf32>
      tpu.vector_store %arg8[%c0_16, %c0_17], %18 {strides = array<i32>} : memref<8x128xf32, #tpu.memory_space<vmem>>, vector<8x128xf32>,
      %cst_18 = arith.constant 0.000000e+00 : f32
      %20 = vector.broadcast %cst_18 : f32 to vector<1x128xf32>
      %c0_19 = arith.constant 0 : index
      %c0_20 = arith.constant 0 : index
      %21 = vector.load %arg9[%c0_19, %c0_20] : memref<1x128xf32, #tpu.memory_space<vmem>>, vector<1x128xf32>
      tpu.vector_store %arg9[%c0_19, %c0_20], %20 {strides = array<i32>} : memref<1x128xf32, #tpu.memory_space<vmem>>, vector<1x128xf32>,
    } else {
    }
    %c0 = arith.constant 0 : index
    %c0_1 = arith.constant 0 : index
    %3 = vector.load %arg5[%c0, %c0_1] : memref<128x128xf32, #tpu.memory_space<vmem>>, vector<128x128xf32>
    %c0_2 = arith.constant 0 : index
    %c0_3 = arith.constant 0 : index
    %4 = vector.load %arg8[%c0_2, %c0_3] : memref<8x128xf32, #tpu.memory_space<vmem>>, vector<8x128xf32>
    %c0_4 = arith.constant 0 : index
    %c0_5 = arith.constant 0 : index
    %5 = vector.load %arg4[%c0_4, %c0_5] : memref<8x128xf32, #tpu.memory_space<vmem>>, vector<8x128xf32>
    %cst = arith.constant dense<0.000000e+00> : vector<8x128xf32>
    %6 = tpu.matmul %5, %3, %cst {dimension_numbers = #tpu.dot_dimension_numbers<[1], [0], [0], [1], [0, 0, 1, 1], [], []>} : vector<8x128xf32>, vector<128x128xf32>, vector<8x128xf32> -> vector<8x128xf32>
    %7 = arith.addf %4, %6 : vector<8x128xf32>
    %c0_6 = arith.constant 0 : index
    %c0_7 = arith.constant 0 : index
    %8 = vector.load %arg8[%c0_6, %c0_7] : memref<8x128xf32, #tpu.memory_space<vmem>>, vector<8x128xf32>
    tpu.vector_store %arg8[%c0_6, %c0_7], %7 {strides = array<i32>} : memref<8x128xf32, #tpu.memory_space<vmem>>, vector<8x128xf32>,
    %c0_8 = arith.constant 0 : index
    %c0_9 = arith.constant 0 : index
    %9 = vector.load %arg9[%c0_8, %c0_9] : memref<1x128xf32, #tpu.memory_space<vmem>>, vector<1x128xf32>
    %10 = math.absf %3 : vector<128x128xf32>
    %cst_10 = arith.constant dense<0.000000e+00> : vector<128xf32>
    %11 = vector.multi_reduction <add>, %10, %cst_10 [0] : vector<128x128xf32> to vector<128xf32>
    %12 = vector.shape_cast %11 : vector<128xf32> to vector<1x128xf32>
    %13 = arith.addf %9, %12 : vector<1x128xf32>
    %c0_11 = arith.constant 0 : index
    %c0_12 = arith.constant 0 : index
    %14 = vector.load %arg9[%c0_11, %c0_12] : memref<1x128xf32, #tpu.memory_space<vmem>>, vector<1x128xf32>
    tpu.vector_store %arg9[%c0_11, %c0_12], %13 {strides = array<i32>} : memref<1x128xf32, #tpu.memory_space<vmem>>, vector<1x128xf32>,
    %c0_i32_13 = arith.constant 0 : i32
    %15 = arith.cmpi eq, %arg2, %c0_i32_13 : i32
    %16 = arith.extui %15 : i1 to i32
    %c0_i32_14 = arith.constant 0 : i32
    %17 = arith.cmpi ne, %16, %c0_i32_14 : i32
    scf.if %17 {
      %c0_15 = arith.constant 0 : index
      %c0_16 = arith.constant 0 : index
      %18 = memref.load %arg3[%c0_15, %c0_16] : memref<1x1xf32, #tpu.memory_space<smem>>
      %cst_17 = arith.constant 0.000000e+00 : f32
      %19 = arith.maximumf %18, %cst_17 : f32
      %20 = math.absf %18 : f32
      %cst_18 = arith.constant 0.000000e+00 : f32
      %21 = arith.subf %cst_18, %20 : f32
      %22 = math.exp %21 : f32
      %23 = math.log1p %22 : f32
      %24 = arith.addf %19, %23 : f32
      %c0_19 = arith.constant 0 : index
      %c0_20 = arith.constant 0 : index
      %25 = vector.load %arg9[%c0_19, %c0_20] : memref<1x128xf32, #tpu.memory_space<vmem>>, vector<1x128xf32>
      %26 = tpu.reciprocal %25 : vector<1x128xf32> -> vector<1x128xf32>
      %27 = vector.broadcast %24 : f32 to vector<1x128xf32>
      %28 = arith.mulf %27, %26 : vector<1x128xf32>
      %cst_21 = arith.constant 1.000000e+00 : f32
      %29 = vector.broadcast %cst_21 : f32 to vector<1x128xf32>
      %30 = arith.minimumf %28, %29 : vector<1x128xf32>
      %c0_22 = arith.constant 0 : index
      %c0_23 = arith.constant 0 : index
      %31 = vector.load %arg8[%c0_22, %c0_23] : memref<8x128xf32, #tpu.memory_space<vmem>>, vector<8x128xf32>
      %32 = vector.broadcast %30 : vector<1x128xf32> to vector<8x128xf32>
      %33 = arith.mulf %31, %32 : vector<8x128xf32>
      %c0_24 = arith.constant 0 : index
      %c0_25 = arith.constant 0 : index
      %34 = vector.load %arg6[%c0_24, %c0_25] : memref<1x128xf32, #tpu.memory_space<vmem>>, vector<1x128xf32>
      %35 = vector.broadcast %34 : vector<1x128xf32> to vector<8x128xf32>
      %36 = arith.addf %33, %35 : vector<8x128xf32>
      %c0_26 = arith.constant 0 : index
      %c0_27 = arith.constant 0 : index
      %37 = vector.load %arg7[%c0_26, %c0_27] : memref<8x128xf32, #tpu.memory_space<vmem>>, vector<8x128xf32>
      tpu.vector_store %arg7[%c0_26, %c0_27], %36 {strides = array<i32>} : memref<8x128xf32, #tpu.memory_space<vmem>>, vector<8x128xf32>,
    } else {
    }
    return
  }
  func.func @transform_0(%arg0: i32, %arg1: i32, %arg2: i32) -> (i32, i32) {
    %c0_i32 = arith.constant 0 : i32
    %c0_i32_0 = arith.constant 0 : i32
    %c0_i32_1 = arith.constant 0 : i32
    return %c0_i32, %c0_i32_0 : i32, i32
  }
  func.func @transform_1(%arg0: i32, %arg1: i32, %arg2: i32) -> (i32, i32) {
    %c0_i32 = arith.constant 0 : i32
    return %arg0, %arg2 : i32, i32
  }
  func.func @transform_2(%arg0: i32, %arg1: i32, %arg2: i32) -> (i32, i32) {
    %c0_i32 = arith.constant 0 : i32
    return %arg2, %arg1 : i32, i32
  }
  func.func @transform_3(%arg0: i32, %arg1: i32, %arg2: i32) -> (i32, i32) {
    %c0_i32 = arith.constant 0 : i32
    %c0_i32_0 = arith.constant 0 : i32
    return %c0_i32, %arg1 : i32, i32
  }
  func.func @transform_4(%arg0: i32, %arg1: i32, %arg2: i32) -> (i32, i32) {
    %c0_i32 = arith.constant 0 : i32
    return %arg0, %arg1 : i32, i32
  }
}

</mosaic_0001>

<llo_original>
// kernel: tpu_custom_call.1
$region0: #{tpu_custom_call.1}
  #allocation0 [shape = 'u32[]', space=smem, size = 0x4, offset = 0x4, fixed_abs, tag = 'smem constant byte address 0x4 - core index']
  #allocation1 [shape = 'u32[144,128]{1,0:T(1,128)}', space=vmem, size = 0x12000, scoped, tag = 'internal scratch']
  #allocation2 [shape = 'f32[8,128]{1,0:T(8,128)}', space=vmem, size = 0x1000, scoped, tag = 'scratch operand']
  #allocation3 [shape = 'f32[1,128]{1,0:T(1,128)}', space=vmem, size = 0x200, scoped, tag = 'scratch operand']
  #allocation4 [shape = 'f32[1,1]{1,0:T(1,128)S(6)}', space=smem, size = 0x200, scoped, tag = 'scoped memory for tpu_custom_call.1']
  %s0 = inlined_call_operand.<no memory space> [shape: f32[1,1], index: 0, kind: input, shape index: {}]
  %s1 = inlined_call_operand.hbm [shape: f32[8,128], index: 1, kind: input, shape index: {}]
  %s2 = inlined_call_operand.hbm [shape: f32[128,128], index: 2, kind: input, shape index: {}]
  %s3 = inlined_call_operand.vmem [shape: f32[1,128], index: 3, kind: input, shape index: {}]
  %s4 = inlined_call_operand.hbm [shape: f32[8,128], index: 4, kind: output, shape index: {}]
  %s5 = sld [smem:[#allocation0]]
  $region42: #{tpu_custom_call.1} parent=0
    _
  %s7 = ssub.s32 1, %s5
  %s8 = scalar_select 0, %s7, %s5
  %9 = sst [smem:[#allocation4]] %s0
  $region1: #{tpu_custom_call.1} parent=0
    #allocation5 [shape = 'u8[4096]{0}', space=vmem, size = 0x1000, scoped, tag = 'input window, operand 1, single buffered']
    #allocation6 [shape = 's32[1]{0}', space=sflag, size = 0x4, scoped, tag = 'scoped memory for tpu_custom_call.1']
    #allocation7 [shape = 's32[1]{0}', space=sflag, size = 0x4, scoped, tag = 'scoped memory for tpu_custom_call.1']
    #allocation8 [shape = 'u8[65536]{0}', space=vmem, size = 0x10000, scoped, tag = 'input window, operand 2, single buffered']
    #allocation9 [shape = 's32[1]{0}', space=sflag, size = 0x4, scoped, tag = 'scoped memory for tpu_custom_call.1']
    #allocation10 [shape = 'u8[4096]{0}', space=vmem, size = 0x1000, scoped, tag = 'output window, operand 0, single buffered']
    %10 = vsyncpa [#allocation6], 0
    %11 = vsyncpa [#allocation9], 0
    %12 = vsyncpa [#allocation7], 0
    // Predicated region
    $region2: #{tpu_custom_call.1} parent=1 // pred_check
      _
    $region3: #{tpu_custom_call.1} parent=1 // pred_check_branch
      %14 = sbr.rel (0) target = $region5
    $region4: #{tpu_custom_call.1} parent=1 // pred_region
      _
    $region5: #{tpu_custom_call.1} parent=1 // pred_fallthru
      _
    // Predicated region
    $region6: #{tpu_custom_call.1} parent=1 // pred_check
      _
    $region7: #{tpu_custom_call.1} parent=1 // pred_check_branch
      %16 = sbr.rel (0) target = $region9
    $region8: #{tpu_custom_call.1} parent=1 // pred_region
      %s18 = ssub.s32 128, 128
      %19 = vsyncadd [#allocation6], %s18
      %s21 = sshll.u32 [#allocation5], 4
      %s22 = int_to_ptr.vmem [resolvable:$true] %s21
      %24 = dma.hbm_to_vmem [thread:$0]  %s1, 128, %s22, [#allocation6]
    $region9: #{tpu_custom_call.1} parent=1 // pred_fallthru
      _
    // Predicated region
    $region10: #{tpu_custom_call.1} parent=1 // pred_check
      _
    $region11: #{tpu_custom_call.1} parent=1 // pred_check_branch
      %26 = sbr.rel (0) target = $region13
    $region12: #{tpu_custom_call.1} parent=1 // pred_region
      %s28 = ssub.s32 2048, 2048
      %29 = vsyncadd [#allocation9], %s28
      %s30 = sshll.u32 [#allocation8], 4
      %s31 = int_to_ptr.vmem [resolvable:$true] %s30
      %36 = dma.hbm_to_vmem [thread:$0]  %s2, 2048, %s31, [#allocation9], 128, 128, 8
    $region13: #{tpu_custom_call.1} parent=1 // pred_fallthru
      _
    // Predicated region
    $region14: #{tpu_custom_call.1} parent=1 // pred_check
      _
    $region15: #{tpu_custom_call.1} parent=1 // pred_check_branch
      %38 = sbr.rel (0) target = $region17
    $region16: #{tpu_custom_call.1} parent=1 // pred_region
      _
    $region17: #{tpu_custom_call.1} parent=1 // pred_fallthru
      _
    // Predicated region
    $region18: #{tpu_custom_call.1} parent=1 // pred_check
      _
    $region19: #{tpu_custom_call.1} parent=1 // pred_check_branch
      %40 = sbr.rel (0) target = $region21
    $region20: #{tpu_custom_call.1} parent=1 // pred_region
      %41 = dma.done [#allocation6], 128
    $region21: #{tpu_custom_call.1} parent=1 // pred_fallthru
      _
    // Predicated region
    $region22: #{tpu_custom_call.1} parent=1 // pred_check
      _
    $region23: #{tpu_custom_call.1} parent=1 // pred_check_branch
      %43 = sbr.rel (0) target = $region25
    $region24: #{tpu_custom_call.1} parent=1 // pred_region
      %44 = dma.done [#allocation9], 2048
    $region25: #{tpu_custom_call.1} parent=1 // pred_fallthru
      _
    %p45 = scmp.eq.s32.totalorder 0, 0
    // Predicated region
    $region26: #{tpu_custom_call.1} parent=1 // pred_check
      %p46 = pneg %p45
    $region27: #{tpu_custom_call.1} parent=1 // pred_check_branch
      %48 = sbr.rel (%p46) target = $region29
    $region28: #{tpu_custom_call.1} parent=1 // pred_region
      %49 = vst [vmem:[#allocation2] sm:$0xff] 0.0
      %50 = vst [vmem:[#allocation3] sm:$0x1] 0.0
    $region29: #{tpu_custom_call.1} parent=1 // pred_fallthru
      _
    %v51 = vld [vmem:[#allocation8] sm:$0xff]
    %v52 = vld [vmem:[#allocation8 + $0x8] sm:$0xff]
    %v53 = vld [vmem:[#allocation8 + $0x10] sm:$0xff]
    %v54 = vld [vmem:[#allocation8 + $0x18] sm:$0xff]
    %v55 = vld [vmem:[#allocation8 + $0x20] sm:$0xff]
    %v56 = vld [vmem:[#allocation8 + $0x28] sm:$0xff]
    %v57 = vld [vmem:[#allocation8 + $0x30] sm:$0xff]
    %v58 = vld [vmem:[#allocation8 + $0x38] sm:$0xff]
    %v59 = vld [vmem:[#allocation8 + $0x40] sm:$0xff]
    %v60 = vld [vmem:[#allocation8 + $0x48] sm:$0xff]
    %v61 = vld [vmem:[#allocation8 + $0x50] sm:$0xff]
    %v62 = vld [vmem:[#allocation8 + $0x58] sm:$0xff]
    %v63 = vld [vmem:[#allocation8 + $0x60] sm:$0xff]
    %v64 = vld [vmem:[#allocation8 + $0x68] sm:$0xff]
    %v65 = vld [vmem:[#allocation8 + $0x70] sm:$0xff]
    %v66 = vld [vmem:[#allocation8 + $0x78] sm:$0xff]
    %v67 = vld [vmem:[#allocation2] sm:$0xff]
    %v68 = vld [vmem:[#allocation5] sm:$0xff]
    %69 = vmatprep.subr.mxu0 0.0
    %70 = vmatpush1.msra.mxu0 %v51
    %71 = vmatprep.subr.mxu0 0.0
    %72 = vmatpush1.msra.mxu0 %v52
    %73 = vmatprep.subr.mxu0 0.0
    %74 = vmatpush1.msra.mxu0 %v53
    %75 = vmatprep.subr.mxu0 0.0
    %76 = vmatpush1.msra.mxu0 %v54
    %77 = vmatprep.subr.mxu0 0.0
    %78 = vmatpush1.msra.mxu0 %v55
    %79 = vmatprep.subr.mxu0 0.0
    %80 = vmatpush1.msra.mxu0 %v56
    %81 = vmatprep.subr.mxu0 0.0
    %82 = vmatpush1.msra.mxu0 %v57
    %83 = vmatprep.subr.mxu0 0.0
    %84 = vmatpush1.msra.mxu0 %v58
    %85 = vmatprep.subr.mxu0 0.0
    %86 = vmatpush1.msra.mxu0 %v59
    %87 = vmatprep.subr.mxu0 0.0
    %88 = vmatpush1.msra.mxu0 %v60
    %89 = vmatprep.subr.mxu0 0.0
    %90 = vmatpush1.msra.mxu0 %v61
    %91 = vmatprep.subr.mxu0 0.0
    %92 = vmatpush1.msra.mxu0 %v62
    %93 = vmatprep.subr.mxu0 0.0
    %94 = vmatpush1.msra.mxu0 %v63
    %95 = vmatprep.subr.mxu0 0.0
    %96 = vmatpush1.msra.mxu0 %v64
    %97 = vmatprep.subr.mxu0 0.0
    %98 = vmatpush1.msra.mxu0 %v65
    %99 = vmatprep.subr.mxu0 0.0
    %100 = vmatpush1.msra.mxu0 %v66
    %101 = vmatprep.subr.mxu0 0.0
    %102 = vmatpush1.msra.mxu0 0.0
    %103 = vmatprep.subr.mxu0 0.0
    %104 = vmatpush1.msra.mxu0 0.0
    %105 = vmatprep.subr.mxu0 0.0
    %106 = vmatpush1.msra.mxu0 0.0
    %107 = vmatprep.subr.mxu0 0.0
    %108 = vmatpush1.msra.mxu0 0.0
    %109 = vmatprep.subr.mxu0 0.0
    %110 = vmatpush1.msra.mxu0 0.0
    %111 = vmatprep.subr.mxu0 0.0
    %112 = vmatpush1.msra.mxu0 0.0
    %113 = vmatprep.subr.mxu0 0.0
    %114 = vmatpush1.msra.mxu0 0.0
    %115 = vmatprep.subr.mxu0 0.0
    %116 = vmatpush1.msra.mxu0 0.0
    %117 = vmatprep.subr.mxu0 0.0
    %118 = vmatpush1.msra.mxu0 0.0
    %119 = vmatprep.subr.mxu0 0.0
    %120 = vmatpush1.msra.mxu0 0.0
    %121 = vmatprep.subr.mxu0 0.0
    %122 = vmatpush1.msra.mxu0 0.0
    %123 = vmatprep.subr.mxu0 0.0
    %124 = vmatpush1.msra.mxu0 0.0
    %125 = vmatprep.subr.mxu0 0.0
    %126 = vmatpush1.msra.mxu0 0.0
    %127 = vmatprep.subr.mxu0 0.0
    %128 = vmatpush1.msra.mxu0 0.0
    %129 = vmatprep.subr.mxu0 0.0
    %130 = vmatpush1.msra.mxu0 0.0
    %131 = vmatprep.subr.mxu0 0.0
    %132 = vmatpush1.msra.mxu0 0.0
    %133 = vmatprep.mubr.f32.mxu0 0.0
    %134 = vmatmul.mubr.f32.gmra.mrb[0].mxu0 %v68
    %v135 = vpop.f32.mrb[0].mxu0
    %v136 = vadd.f32 0.0, %v135
    %v137 = vpop.f32.mrb[0].mxu0
    %138 = vdwg.mxu0
    %v139 = vadd.f32 %v67, %v136
    %140 = vst [vmem:[#allocation2] sm:$0xff] %v139
    %v141 = vld [vmem:[#allocation3] sm:$0x1]
    %v142 = vand.u32 2147483647, %v51
    %v143 = vand.u32 2147483647, %v52
    %v144 = vand.u32 2147483647, %v53
    %v145 = vand.u32 2147483647, %v54
    %v146 = vand.u32 2147483647, %v55
    %v147 = vand.u32 2147483647, %v56
    %v148 = vand.u32 2147483647, %v57
    %v149 = vand.u32 2147483647, %v58
    %v150 = vand.u32 2147483647, %v59
    %v151 = vand.u32 2147483647, %v60
    %v152 = vand.u32 2147483647, %v61
    %v153 = vand.u32 2147483647, %v62
    %v154 = vand.u32 2147483647, %v63
    %v155 = vand.u32 2147483647, %v64
    %v156 = vand.u32 2147483647, %v65
    %v157 = vand.u32 2147483647, %v66
    %v158 = vadd.f32 %v142, %v143
    %v159 = vadd.f32 %v158, %v144
    %v160 = vadd.f32 %v159, %v145
    %v161 = vadd.f32 %v160, %v146
    %v162 = vadd.f32 %v161, %v147
    %v163 = vadd.f32 %v162, %v148
    %v164 = vadd.f32 %v163, %v149
    %v165 = vadd.f32 %v164, %v150
    %v166 = vadd.f32 %v165, %v151
    %v167 = vadd.f32 %v166, %v152
    %v168 = vadd.f32 %v167, %v153
    %v169 = vadd.f32 %v168, %v154
    %v170 = vadd.f32 %v169, %v155
    %v171 = vadd.f32 %v170, %v156
    %v172 = vadd.f32 %v171, %v157
    %v173 = vrot.slane %v172, 4
    %v174 = vadd.f32 %v172, %v173
    %v175 = vrot.slane %v174, 2
    %v176 = vadd.f32 %v174, %v175
    %v177 = vrot.slane %v176, 1
    %v178 = vadd.f32 %v176, %v177
    %v179 = vadd.f32 %v141, %v178
    %180 = vst [vmem:[#allocation3] sm:$0x1] %v179
    // Predicated region
    $region30: #{tpu_custom_call.1} parent=1 // pred_check
      %p181 = pneg %p45
    $region31: #{tpu_custom_call.1} parent=1 // pred_check_branch
      %183 = sbr.rel (%p181) target = $region33
    $region32: #{tpu_custom_call.1} parent=1 // pred_region
      %s184 = sld [smem:[#allocation4]]
      %s185 = smax.f32 %s184, 0.0
      %s186 = sand.u32 2147483647, %s184
      %s187 = ssub.f32 0.0, %s186
      %v188 = vstv %s187
      %v189 = vmul.f32 %v188, 1.442695
      %v190 = vpow.pop %v189
      %s191 = vtos %v190
      %v192 = vstv %s191
      %v193 = vadd.f32 %v192, 1.0
      %v194 = vlog2.pop %v193
      %v195 = vmul.f32 %v194, 0.6931472
      %v196 = vmul.f32 -0.5, %v192
      %v197 = vadd.f32 %v196, 1.0
      %v198 = vmul.f32 %v197, %v192
      %v199 = vand.u32 2147483647, %v192
      %vm200 = vcmp.lt.f32.partialorder %v199, 0.0004427343
      %v201 = vsel %vm200, %v198, %v195
      %s202 = vtos %v201
      %s203 = sadd.f32 %s185, %s202
      %v204 = vld [vmem:[#allocation3] sm:$0x1]
      %v205 = vrcp.pop %v204
      %v206 = vstv %s203
      %v207 = vmul.f32 %v206, %v205
      %v208 = vmin.f32 %v207, 1.0
      %v209 = vld [vmem:[#allocation2] sm:$0xff]
      %v211 = vlaneseq
      %v212 = vshrl.u32 %v211, 7
      %v213 = vsub.s32 0, %v212
      %v214 = vrot.slane %v208, %v213
      %v216 = vmul.f32 %v209, %v214
      %v217 = vld [vmem:[%s3] sm:$0x1]
      %v219 = vlaneseq
      %v220 = vshrl.u32 %v219, 7
      %v221 = vsub.s32 0, %v220
      %v222 = vrot.slane %v217, %v221
      %v224 = vadd.f32 %v216, %v222
      %225 = vst [vmem:[#allocation10] sm:$0xff] %v224
    $region33: #{tpu_custom_call.1} parent=1 // pred_fallthru
      _
    // Predicated region
    $region34: #{tpu_custom_call.1} parent=1 // pred_check
      _
    $region35: #{tpu_custom_call.1} parent=1 // pred_check_branch
      %227 = sbr.rel (0) target = $region37
    $region36: #{tpu_custom_call.1} parent=1 // pred_region
      %s229 = ssub.s32 128, 128
      %230 = vsyncadd [#allocation7], %s229
      %s232 = sshll.u32 [#allocation10], 4
      %s233 = int_to_ptr.vmem [resolvable:$true] %s232
      %235 = dma.vmem_to_hbm [thread:$0]  %s233, 128, %s4, [#allocation7]
    $region37: #{tpu_custom_call.1} parent=1 // pred_fallthru
      _
    // Predicated region
    $region38: #{tpu_custom_call.1} parent=1 // pred_check
      _
    $region39: #{tpu_custom_call.1} parent=1 // pred_check_branch
      %237 = sbr.rel (0) target = $region41
    $region40: #{tpu_custom_call.1} parent=1 // pred_region
      %238 = dma.done [#allocation7], 128
    $region41: #{tpu_custom_call.1} parent=1 // pred_fallthru
      _
    %239 = vsyncpa [#allocation6], 1
    %240 = vsyncpa [#allocation9], 1
    %241 = vsyncpa [#allocation7], 1

</llo_original>
